<compile_context>
chip_gen: v7x
topology: tpu7x:2x2x1
jax: 0.10.0
libtpu: 0.0.40
codegen_flags: <defaults>
</compile_context>

<pallas_src>
from collections import namedtuple

import jax
import jax.numpy as jnp
import numpy as np
from jax.experimental import pallas as pl
from jax.experimental.pallas import tpu as pltpu


# ---------------------------------------------------------------------------
# Kernel: one row-block of nodes per inner grid step; output [S, G, O] holds
# one resident [G, O] partial accumulator per split (per TensorCore on v7x).
# ---------------------------------------------------------------------------
def gcn_embedder_kernel(a_ref, p_ref, xw1_ref, b1_ref, w2_ref, o_ref):
    @pl.when(pl.program_id(1) == 0)
    def _init():
        o_ref[...] = jnp.zeros_like(o_ref)

    # Layer 1 for this row block: relu(A_rows @ (X @ W1) + b1).
    h1 = jnp.dot(a_ref[...], xw1_ref[...],
                 preferred_element_type=jnp.float32)                   # [tm, H] f32
    h1 = jnp.maximum(h1 + b1_ref[...], 0.0)

    # Layer 2 with mean-pool folded:  o += (pool @ A)[:, rows] @ (h1 @ W2).
    hw2 = jnp.dot(h1.astype(w2_ref.dtype), w2_ref[...],
                  preferred_element_type=jnp.float32)                  # [tm, O] f32
    contrib = jnp.dot(p_ref[0], hw2,                                   # f32 @ f32
                      preferred_element_type=jnp.float32)              # [G, O]
    o_ref[...] += contrib[None, :, :]


# ---------------------------------------------------------------------------
# Topology glue (cache this for static graphs; it holds all O(N^2) work).
# ---------------------------------------------------------------------------
GraphCache = namedtuple(
    "GraphCache",
    ["a_pad", "p_blocks", "pool_rowsum", "n_pad", "tm",
     "num_splits", "blocks_per_split", "vmem_limit", "stream_dtype"])


def _build_norm_adj(edge_index, num_nodes):
    """Dense D^-1/2 (A + I) D^-1/2, matching PyG gcn_norm (add_self_loops=True)."""
    src, dst = edge_index[0], edge_index[1]
    a = jnp.zeros((num_nodes, num_nodes), jnp.float32).at[dst, src].add(1.0)
    a = a + jnp.eye(num_nodes, dtype=jnp.float32)
    deg = a.sum(axis=1)
    dinv = jnp.where(deg > 0, 1.0 / jnp.sqrt(deg), 0.0)
    return dinv[:, None] * a * dinv[None, :]


def _build_mean_pool(batch, num_graphs):
    onehot = (batch[None, :] == jnp.arange(num_graphs)[:, None]).astype(jnp.float32)
    counts = onehot.sum(axis=1, keepdims=True)
    return onehot / jnp.maximum(counts, 1.0)


def _round_up(x, m):
    return ((x + m - 1) // m) * m


def _vmem_limit_bytes():
    """Generation-aware VMEM budget with headroom for Mosaic scratch."""
    phys = 64 * 1024 * 1024          # conservative fallback (v7x per-core VMEM)
    try:
        info = pltpu.get_tpu_info()
        cap = getattr(info, "vmem_capacity_bytes", None)
        if cap:
            phys = int(cap)
    except Exception:
        pass
    return max(int(phys * 3 // 4), 32 * 1024 * 1024)


def _largest_divisor_multiple_of(total, unit, cap):
    """Largest d with d % unit == 0, total % d == 0, d <= cap (total % unit == 0)."""
    best = unit
    d = unit
    limit = min(total, max(cap, unit))
    while d <= limit:
        if total % d == 0:
            best = d
        d += unit
    return best


def _select_tiling(n, g, h, o, stream_bytes, num_splits, vmem_limit):
    """Pad N to a lane-dense multiple of 128*splits and pick the biggest row
    tile that fits the double-buffered A block (the binding VMEM consumer)."""
    n_pad = _round_up(max(n, 1), 128 * num_splits)
    # Resident / double-buffered operands besides the streamed A row block.
    resident = (2 * n_pad * h * stream_bytes        # XW1 (double-buffered)
                + 2 * h * o * stream_bytes          # W2
                + 2 * h * 4                         # b1
                + 2 * g * o * 4)                    # output partial
    # Per-tile-row bytes: A (x2 buffers) + P block (f32, x2) + f32 intermediates.
    per_row = (2 * n_pad * stream_bytes
               + 2 * g * 4
               + (h + o) * 4)
    avail = int(vmem_limit * 0.9) - resident
    tm_cap = max(avail // max(per_row, 1), 128)
    tm_cap = min(tm_cap, 2048)
    per_split = n_pad // num_splits                 # multiple of 128
    tm = _largest_divisor_multiple_of(per_split, 128, tm_cap)
    return n_pad, tm


def preprocess_graph(edge_index, batch, num_nodes, num_graphs,
                     hidden_channels, out_channels,
                     stream_dtype=jnp.bfloat16, num_splits=2):
    """All O(N^2) topology work: norm adjacency, pooled propagation, padding,
    dtype cast and P blocking.  Cache the result for static graphs."""
    hi = jax.lax.Precision.HIGHEST
    a_norm = _build_norm_adj(edge_index, num_nodes)                       # [N, N]
    pool = _build_mean_pool(batch, num_graphs)                            # [G, N]
    p = jnp.dot(pool, a_norm, precision=hi)                               # [G, N]
    pool_rowsum = pool.sum(axis=1, keepdims=True)                         # [G, 1]

    vmem_limit = _vmem_limit_bytes()
    stream_bytes = np.dtype(stream_dtype).itemsize
    n_pad, tm = _select_tiling(num_nodes, num_graphs, hidden_channels,
                               out_channels, stream_bytes, num_splits, vmem_limit)

    # Pad (zero rows/cols contribute nothing), cast A once, pre-block P (f32).
    a_pad = jnp.zeros((n_pad, n_pad), stream_dtype)
    a_pad = a_pad.at[:num_nodes, :num_nodes].set(a_norm.astype(stream_dtype))
    p_pad = jnp.zeros((num_graphs, n_pad), jnp.float32).at[:, :num_nodes].set(p)
    n_blocks = n_pad // tm
    p_blocks = p_pad.reshape(num_graphs, n_blocks, tm).transpose(1, 0, 2)  # [nb, G, tm]

    return GraphCache(a_pad, p_blocks, pool_rowsum, n_pad, tm,
                      num_splits, n_blocks // num_splits, vmem_limit, stream_dtype)


# ---------------------------------------------------------------------------
# Pallas-backed forward.
# ---------------------------------------------------------------------------
def gcn_graph_embedder(x, edge_index, batch, params, num_graphs,
                       stream_dtype=jnp.bfloat16, graph_cache=None, num_splits=2):
    n, _ = x.shape
    w1, b1, w2, b2 = params
    h = w1.shape[1]
    o = w2.shape[1]
    g = num_graphs

    if graph_cache is None:
        graph_cache = preprocess_graph(edge_index, batch, n, g, h, o,
                                       stream_dtype=stream_dtype,
                                       num_splits=num_splits)
    gc = graph_cache
    n_pad, tm, splits, bps = gc.n_pad, gc.tm, gc.num_splits, gc.blocks_per_split

    # Layer-1 feature transform hoisted out of the O(N^2) propagation (O(N*C*H),
    # recomputed per call so training still works).
    xw1 = jnp.dot(x, w1, precision=jax.lax.Precision.HIGHEST)             # [N, H] f32
    xw1_pad = jnp.zeros((n_pad, h), gc.stream_dtype).at[:n].set(
        xw1.astype(gc.stream_dtype))

    partials = pl.pallas_call(
        gcn_embedder_kernel,
        out_shape=jax.ShapeDtypeStruct((splits, g, o), jnp.float32),
        grid_spec=pltpu.PrefetchScalarGridSpec(
            num_scalar_prefetch=0,
            grid=(splits, bps),
            in_specs=[
                # A row block: streamed from HBM exactly once.
                pl.BlockSpec((tm, n_pad), lambda c, i: (c * bps + i, 0)),
                # (pool @ A) column block for the same rows (f32).
                pl.BlockSpec((1, g, tm), lambda c, i: (c * bps + i, 0, 0)),
                # Resident operands.
                pl.BlockSpec((n_pad, h), lambda c, i: (0, 0)),            # XW1
                pl.BlockSpec((1, h), lambda c, i: (0, 0)),                # b1
                pl.BlockSpec((h, o), lambda c, i: (0, 0)),                # W2
            ],
            out_specs=pl.BlockSpec((1, g, o), lambda c, i: (c, 0, 0)),    # per-split acc
        ),
        compiler_params=pltpu.CompilerParams(
            dimension_semantics=("parallel", "arbitrary"),
            vmem_limit_bytes=gc.vmem_limit,
        ),
    )(gc.a_pad, gc.p_blocks, xw1_pad,
      b1.reshape(1, -1).astype(jnp.float32),
      w2.astype(gc.stream_dtype))

    # Sum per-split partials; add the pooled layer-2 bias (== b2 per non-empty graph).
    return partials.sum(axis=0) + gc.pool_rowsum * b2[None, :]


# ---------------------------------------------------------------------------
# Pure-JAX reference (original association, high-precision matmuls).
# ---------------------------------------------------------------------------
def gcn_graph_embedder_ref(x, edge_index, batch, params, num_graphs):
    a_norm = _build_norm_adj(edge_index, x.shape[0])
    pool = _build_mean_pool(batch, num_graphs)
    w1, b1, w2, b2 = params
    hi = jax.lax.Precision.HIGHEST
    h1 = jnp.maximum(
        jnp.dot(a_norm, jnp.dot(x, w1, precision=hi), precision=hi) + b1, 0.0)
    h2 = jnp.dot(a_norm, jnp.dot(h1, w2, precision=hi), precision=hi) + b2
    return jnp.dot(pool, h2, precision=hi)


def init_params(key, in_channels, hidden_channels, out_channels):
    k1, k2 = jax.random.split(key)

    def glorot(k, fan_in, fan_out):
        lim = jnp.sqrt(6.0 / (fan_in + fan_out))
        return jax.random.uniform(k, (fan_in, fan_out), jnp.float32, -lim, lim)

    w1 = glorot(k1, in_channels, hidden_channels)
    b1 = jnp.zeros((hidden_channels,), jnp.float32)
    w2 = glorot(k2, hidden_channels, out_channels)
    b2 = jnp.zeros((out_channels,), jnp.float32)
    return (w1, b1, w2, b2)


if __name__ == "__main__":
    in_channels, hidden_channels, out_channels = 8, 32, 32
    num_graphs, nodes_per_graph = 2, 12
    n_nodes = num_graphs * nodes_per_graph

    key = jax.random.PRNGKey(0)
    kx, kp = jax.random.split(key)
    x = jax.random.normal(kx, (n_nodes, in_channels), jnp.float32)

    # Deterministic edges: bidirectional ring inside each graph.
    src_list, dst_list = [], []
    for gidx in range(num_graphs):
        base = gidx * nodes_per_graph
        for i in range(nodes_per_graph):
            a = base + i
            b = base + (i + 1) % nodes_per_graph
            src_list += [a, b]
            dst_list += [b, a]
    edge_index = jnp.array([src_list, dst_list], dtype=jnp.int32)
    batch = jnp.repeat(jnp.arange(num_graphs, dtype=jnp.int32), nodes_per_graph)

    params = init_params(kp, in_channels, hidden_channels, out_channels)
    ref = gcn_graph_embedder_ref(x, edge_index, batch, params, num_graphs)

    # Topology glue computed once per stream dtype (cacheable for static graphs).
    cache_f32 = preprocess_graph(edge_index, batch, n_nodes, num_graphs,
                                 hidden_channels, out_channels,
                                 stream_dtype=jnp.float32)
    cache_bf16 = preprocess_graph(edge_index, batch, n_nodes, num_graphs,
                                  hidden_channels, out_channels,
                                  stream_dtype=jnp.bfloat16)

    # f32 streaming: exact (up to reassociation) match against the reference.
    out_f32 = gcn_graph_embedder(x, edge_index, batch, params, num_graphs,
                                 graph_cache=cache_f32)
    out_f32 = jax.block_until_ready(out_f32)
    np.testing.assert_allclose(np.asarray(out_f32), np.asarray(ref),
                               rtol=1e-4, atol=1e-4)

    # bf16 streaming (default fast path): f32 accumulation, looser tolerance.
    out_bf16 = gcn_graph_embedder(x, edge_index, batch, params, num_graphs,
                                  graph_cache=cache_bf16)
    out_bf16 = jax.block_until_ready(out_bf16)
    np.testing.assert_allclose(np.asarray(out_bf16), np.asarray(ref),
                               rtol=2e-2, atol=2e-2)

    print("KERNEL_OK")
</pallas_src>

<mosaic_0001>
module attributes {stable_mosaic.version = 11 : i64} {
  func.func @gcn_embedder_kernel(%arg0: i32, %arg1: i32, %arg2: memref<128x256xf32, #tpu.memory_space<vmem>>, %arg3: memref<1x2x128xf32, #tpu.memory_space<vmem>>, %arg4: memref<256x32xf32, #tpu.memory_space<vmem>>, %arg5: memref<1x32xf32, #tpu.memory_space<vmem>>, %arg6: memref<32x32xf32, #tpu.memory_space<vmem>>, %arg7: memref<1x2x32xf32, #tpu.memory_space<vmem>>) attributes {dimension_semantics = [#tpu.dimension_semantics<parallel>, #tpu.dimension_semantics<arbitrary>], iteration_bounds = array<i64: 2, 1>, scalar_prefetch = 0 : i64, scratch_operands = 0 : i64, tpu.core_type = #tpu.core_type<tc>, window_params = [{transform_indices = @transform_0, window_bounds = array<i64: 128, 256>}, {transform_indices = @transform_1, window_bounds = array<i64: 1, 2, 128>}, {pipeline_mode = #tpu.pipeline_mode<synchronous>, transform_indices = @transform_2, window_bounds = array<i64: 256, 32>}, {pipeline_mode = #tpu.pipeline_mode<synchronous>, transform_indices = @transform_3, window_bounds = array<i64: 1, 32>}, {pipeline_mode = #tpu.pipeline_mode<synchronous>, transform_indices = @transform_4, window_bounds = array<i64: 32, 32>}, {transform_indices = @transform_5, window_bounds = array<i64: 1, 2, 32>}]} {
    %c0_i32 = arith.constant 0 : i32
    %0 = arith.cmpi eq, %arg1, %c0_i32 : i32
    %1 = arith.extui %0 : i1 to i32
    %c0_i32_0 = arith.constant 0 : i32
    %2 = arith.cmpi ne, %1, %c0_i32_0 : i32
    scf.if %2 {
      %cst_20 = arith.constant 0.000000e+00 : f32
      %20 = vector.broadcast %cst_20 : f32 to vector<1x2x32xf32>
      %c0_21 = arith.constant 0 : index
      %c0_22 = arith.constant 0 : index
      %c0_23 = arith.constant 0 : index
      %21 = vector.load %arg7[%c0_21, %c0_22, %c0_23] : memref<1x2x32xf32, #tpu.memory_space<vmem>>, vector<1x2x32xf32>
      tpu.vector_store %arg7[%c0_21, %c0_22, %c0_23], %20 {strides = array<i32>} : memref<1x2x32xf32, #tpu.memory_space<vmem>>, vector<1x2x32xf32>,
    } else {
    }
    %c0 = arith.constant 0 : index
    %c0_1 = arith.constant 0 : index
    %3 = vector.load %arg2[%c0, %c0_1] : memref<128x256xf32, #tpu.memory_space<vmem>>, vector<128x256xf32>
    %c0_2 = arith.constant 0 : index
    %c0_3 = arith.constant 0 : index
    %4 = vector.load %arg4[%c0_2, %c0_3] : memref<256x32xf32, #tpu.memory_space<vmem>>, vector<256x32xf32>
    %cst = arith.constant dense<0.000000e+00> : vector<128x32xf32>
    %5 = tpu.matmul %3, %4, %cst {dimension_numbers = #tpu.dot_dimension_numbers<[1], [0], [0], [1], [0, 0, 1, 1], [], []>} : vector<128x256xf32>, vector<256x32xf32>, vector<128x32xf32> -> vector<128x32xf32>
    %c0_4 = arith.constant 0 : index
    %c0_5 = arith.constant 0 : index
    %6 = vector.load %arg5[%c0_4, %c0_5] : memref<1x32xf32, #tpu.memory_space<vmem>>, vector<1x32xf32>
    %7 = vector.broadcast %6 : vector<1x32xf32> to vector<128x32xf32>
    %8 = arith.addf %5, %7 : vector<128x32xf32>
    %cst_6 = arith.constant 0.000000e+00 : f32
    %9 = vector.broadcast %cst_6 : f32 to vector<128x32xf32>
    %10 = arith.maximumf %8, %9 : vector<128x32xf32>
    %c0_7 = arith.constant 0 : index
    %c0_8 = arith.constant 0 : index
    %11 = vector.load %arg6[%c0_7, %c0_8] : memref<32x32xf32, #tpu.memory_space<vmem>>, vector<32x32xf32>
    %cst_9 = arith.constant dense<0.000000e+00> : vector<128x32xf32>
    %12 = tpu.matmul %10, %11, %cst_9 {dimension_numbers = #tpu.dot_dimension_numbers<[1], [0], [0], [1], [0, 0, 1, 1], [], []>} : vector<128x32xf32>, vector<32x32xf32>, vector<128x32xf32> -> vector<128x32xf32>
    %c0_10 = arith.constant 0 : index
    %c0_11 = arith.constant 0 : index
    %c0_12 = arith.constant 0 : index
    %13 = vector.load %arg3[%c0_10, %c0_11, %c0_12] : memref<1x2x128xf32, #tpu.memory_space<vmem>>, vector<1x2x128xf32>
    %14 = vector.shape_cast %13 : vector<1x2x128xf32> to vector<2x128xf32>
    %cst_13 = arith.constant dense<0.000000e+00> : vector<2x32xf32>
    %15 = tpu.matmul %14, %12, %cst_13 {dimension_numbers = #tpu.dot_dimension_numbers<[1], [0], [0], [1], [0, 0, 1, 1], [], []>} : vector<2x128xf32>, vector<128x32xf32>, vector<2x32xf32> -> vector<2x32xf32>
    %c0_14 = arith.constant 0 : index
    %c0_15 = arith.constant 0 : index
    %c0_16 = arith.constant 0 : index
    %16 = vector.load %arg7[%c0_14, %c0_15, %c0_16] : memref<1x2x32xf32, #tpu.memory_space<vmem>>, vector<1x2x32xf32>
    %17 = vector.shape_cast %15 : vector<2x32xf32> to vector<1x2x32xf32>
    %18 = arith.addf %16, %17 : vector<1x2x32xf32>
    %c0_17 = arith.constant 0 : index
    %c0_18 = arith.constant 0 : index
    %c0_19 = arith.constant 0 : index
    %19 = vector.load %arg7[%c0_17, %c0_18, %c0_19] : memref<1x2x32xf32, #tpu.memory_space<vmem>>, vector<1x2x32xf32>
    tpu.vector_store %arg7[%c0_17, %c0_18, %c0_19], %18 {strides = array<i32>} : memref<1x2x32xf32, #tpu.memory_space<vmem>>, vector<1x2x32xf32>,
    return
  }
  func.func @transform_0(%arg0: i32, %arg1: i32) -> (i32, i32) {
    %c1_i32 = arith.constant 1 : i32
    %0 = arith.muli %arg0, %c1_i32 : i32
    %1 = arith.addi %0, %arg1 : i32
    %c0_i32 = arith.constant 0 : i32
    %c0_i32_0 = arith.constant 0 : i32
    return %1, %c0_i32 : i32, i32
  }
  func.func @transform_1(%arg0: i32, %arg1: i32) -> (i32, i32, i32) {
    %c1_i32 = arith.constant 1 : i32
    %0 = arith.muli %arg0, %c1_i32 : i32
    %1 = arith.addi %0, %arg1 : i32
    %c0_i32 = arith.constant 0 : i32
    %c0_i32_0 = arith.constant 0 : i32
    %c0_i32_1 = arith.constant 0 : i32
    return %1, %c0_i32, %c0_i32_0 : i32, i32, i32
  }
  func.func @transform_2(%arg0: i32, %arg1: i32) -> (i32, i32) {
    %c0_i32 = arith.constant 0 : i32
    %c0_i32_0 = arith.constant 0 : i32
    %c0_i32_1 = arith.constant 0 : i32
    return %c0_i32, %c0_i32_0 : i32, i32
  }
  func.func @transform_3(%arg0: i32, %arg1: i32) -> (i32, i32) {
    %c0_i32 = arith.constant 0 : i32
    %c0_i32_0 = arith.constant 0 : i32
    %c0_i32_1 = arith.constant 0 : i32
    return %c0_i32, %c0_i32_0 : i32, i32
  }
  func.func @transform_4(%arg0: i32, %arg1: i32) -> (i32, i32) {
    %c0_i32 = arith.constant 0 : i32
    %c0_i32_0 = arith.constant 0 : i32
    %c0_i32_1 = arith.constant 0 : i32
    return %c0_i32, %c0_i32_0 : i32, i32
  }
  func.func @transform_5(%arg0: i32, %arg1: i32) -> (i32, i32, i32) {
    %c0_i32 = arith.constant 0 : i32
    %c0_i32_0 = arith.constant 0 : i32
    %c0_i32_1 = arith.constant 0 : i32
    return %arg0, %c0_i32, %c0_i32_0 : i32, i32, i32
  }
}

</mosaic_0001>

<llo_original>
// kernel: tpu_custom_call.1
$region0: #{tpu_custom_call.1}
  #allocation0 [shape = 'u32[]', space=smem, size = 0x4, offset = 0x4, fixed_abs, tag = 'smem constant byte address 0x4 - core index']
  #allocation1 [shape = 'u32[144,128]{1,0:T(1,128)}', space=vmem, size = 0x12000, scoped, tag = 'internal scratch']
  %s0 = inlined_call_operand.hbm [shape: f32[256,256], index: 0, kind: input, shape index: {}]
  %s1 = inlined_call_operand.vmem [shape: f32[2,2,128], index: 1, kind: input, shape index: {}]
  %s2 = inlined_call_operand.vmem [shape: f32[256,32], index: 2, kind: input, shape index: {}]
  %s3 = inlined_call_operand.vmem [shape: f32[1,32], index: 3, kind: input, shape index: {}]
  %s4 = inlined_call_operand.vmem [shape: f32[32,32], index: 4, kind: input, shape index: {}]
  %s5 = inlined_call_operand.hbm [shape: f32[2,2,32], index: 5, kind: output, shape index: {}]
  %s6 = sld [smem:[#allocation0]]
  $region61: #{tpu_custom_call.1} parent=0
    _
  %s8 = ssub.s32 1, %s6
  %s9 = scalar_select 0, %s8, %s6
  $region1: #{tpu_custom_call.1} parent=0
    #allocation2 [shape = 'u8[262144]{0}', space=vmem, size = 0x40000, scoped, tag = 'input window, operand 0']
    #allocation3 [shape = 's32[2]{0}', space=sflag, size = 0x8, scoped, tag = 'scoped memory for tpu_custom_call.1']
    #allocation4 [shape = 's32[2]{0}', space=sflag, size = 0x8, scoped, tag = 'scoped memory for tpu_custom_call.1']
    #allocation5 [shape = 'u8[2048]{0}', space=vmem, size = 0x800, scoped, tag = 'output window, operand 0']
    %10 = vsyncpa [#allocation3], 0
    %s11 = scalar_lea.sflag [#allocation3], 1
    %12 = vsyncpa %s11, 0
    %13 = vsyncpa [#allocation4], 0
    %s14 = scalar_lea.sflag [#allocation4], 1
    %15 = vsyncpa %s14, 0
    loop: start=0, step=1, limit=4
    $region2: #{tpu_custom_call.1} parent=1 // loop_pre_header
      _
    $region3: #{tpu_custom_call.1} parent=1 // loop_header
      %s17 = sphi 0, %s21
      %p18 = scmp.ge.s32.totalorder %s17, 4
      %s24 = sphi 0, %s36
      %s25 = sphi 0, %s32
      %s26 = sphi 0, %s24
      %s27 = sphi 0, %s25
      %s28 = sphi 0, %s26
      %s29 = sphi 0, %s27
      %s41 = sphi 0, %s43
      %s44 = sphi 0, %s41
      %s45 = sphi 0, %s44
      %s61 = sphi 0, %s45
      %s69 = sphi 0, %s71
      %s72 = sphi 0, %s69
      %s73 = sphi 0, %s72
      %s89 = sphi 0, %s73
      %s93 = sphi 0, %s93
      %s95 = sphi 0, %s93
      %s96 = sphi 0, %s95
      %s110 = sphi 0, %s96
      %s114 = sphi 0, %s114
      %s116 = sphi 0, %s114
      %s117 = sphi 0, %s116
      %s131 = sphi 0, %s117
      %s135 = sphi 0, %s135
      %s137 = sphi 0, %s135
      %s138 = sphi 0, %s137
      %s152 = sphi 0, %s138
      %s158 = sphi 0, %s160
      %s161 = sphi 0, %s158
      %s162 = sphi 0, %s161
      %s178 = sphi 0, %s162
    $region4: #{tpu_custom_call.1} parent=1 // loop_header_branch
      %20 = sbr.rel (%p18) target = $region8
    $region5: #{tpu_custom_call.1} parent=1 // loop_body
      %s22 = ssub.s32 %s17, 1
      %s23 = ssub.s32 %s17, 2
      %s30 = sadd.s32 1, %s25
      %p31 = scmp.ge.s32.totalorder %s30, 1
      %s32 = scalar_select %p31, 0, %s30
      %s33 = sadd.s32 1, %s24
      %s34 = scalar_select %p31, %s33, %s24
      %p35 = scmp.ge.s32.totalorder %s34, 2
      %s36 = scalar_select %p35, 0, %s34
      %s37 = sadd.s32 %s24, %s25
      %s38 = sadd.s32 %s36, %s32
      %s39 = ssub.s32 %s37, %s38
      %p40 = scmp.eq.s32.totalorder %s39, 0
      %s42 = sadd.s32 %s41, 1
      %s43 = scalar_select %p40, %s41, %s42
      %p46 = pneg %p40
      %p47 = scmp.eq.s32.totalorder %s17, 1
      %p48 = por %p46, %p47
      %p49 = scmp.ne.s32.totalorder %s41, %s44
      %p50 = scmp.eq.s32.totalorder %s17, 0
      %p51 = por %p49, %p50
      %p52 = scmp.ne.s32.totalorder %s41, %s44
      %p53 = scmp.eq.s32.totalorder %s22, 1
      %p54 = por %p52, %p53
      %p55 = scmp.ne.s32.totalorder %s44, %s45
      %p56 = scmp.eq.s32.totalorder %s22, 0
      %p57 = por %p55, %p56
      %p58 = scmp.ne.s32.totalorder %s44, %s45
      %p59 = scmp.eq.s32.totalorder %s23, 1
      %p60 = por %p58, %p59
      %p62 = scmp.ne.s32.totalorder %s45, %s61
      %p63 = scmp.eq.s32.totalorder %s23, 0
      %p64 = por %p62, %p63
      %s65 = sadd.s32 %s24, %s25
      %s66 = sadd.s32 %s36, %s32
      %s67 = ssub.s32 %s65, %s66
      %p68 = scmp.eq.s32.totalorder %s67, 0
      %s70 = sadd.s32 %s69, 1
      %s71 = scalar_select %p68, %s69, %s70
      %p74 = pneg %p68
      %p75 = scmp.eq.s32.totalorder %s17, 1
      %p76 = por %p74, %p75
      %p77 = scmp.ne.s32.totalorder %s69, %s72
      %p78 = scmp.eq.s32.totalorder %s17, 0
      %p79 = por %p77, %p78
      %p80 = scmp.ne.s32.totalorder %s69, %s72
      %p81 = scmp.eq.s32.totalorder %s22, 1
      %p82 = por %p80, %p81
      %p83 = scmp.ne.s32.totalorder %s72, %s73
      %p84 = scmp.eq.s32.totalorder %s22, 0
      %p85 = por %p83, %p84
      %p86 = scmp.ne.s32.totalorder %s72, %s73
      %p87 = scmp.eq.s32.totalorder %s23, 1
      %p88 = por %p86, %p87
      %p90 = scmp.ne.s32.totalorder %s73, %s89
      %p91 = scmp.eq.s32.totalorder %s23, 0
      %p92 = por %p90, %p91
      %s94 = sadd.s32 %s93, 1
      %p97 = scmp.eq.s32.totalorder %s17, 1
      %p98 = scmp.ne.s32.totalorder %s93, %s95
      %p99 = scmp.eq.s32.totalorder %s17, 0
      %p100 = por %p98, %p99
      %p101 = scmp.ne.s32.totalorder %s93, %s95
      %p102 = scmp.eq.s32.totalorder %s22, 1
      %p103 = por %p101, %p102
      %p104 = scmp.ne.s32.totalorder %s95, %s96
      %p105 = scmp.eq.s32.totalorder %s22, 0
      %p106 = por %p104, %p105
      %p107 = scmp.ne.s32.totalorder %s95, %s96
      %p108 = scmp.eq.s32.totalorder %s23, 1
      %p109 = por %p107, %p108
      %p111 = scmp.ne.s32.totalorder %s96, %s110
      %p112 = scmp.eq.s32.totalorder %s23, 0
      %p113 = por %p111, %p112
      %s115 = sadd.s32 %s114, 1
      %p118 = scmp.eq.s32.totalorder %s17, 1
      %p119 = scmp.ne.s32.totalorder %s114, %s116
      %p120 = scmp.eq.s32.totalorder %s17, 0
      %p121 = por %p119, %p120
      %p122 = scmp.ne.s32.totalorder %s114, %s116
      %p123 = scmp.eq.s32.totalorder %s22, 1
      %p124 = por %p122, %p123
      %p125 = scmp.ne.s32.totalorder %s116, %s117
      %p126 = scmp.eq.s32.totalorder %s22, 0
      %p127 = por %p125, %p126
      %p128 = scmp.ne.s32.totalorder %s116, %s117
      %p129 = scmp.eq.s32.totalorder %s23, 1
      %p130 = por %p128, %p129
      %p132 = scmp.ne.s32.totalorder %s117, %s131
      %p133 = scmp.eq.s32.totalorder %s23, 0
      %p134 = por %p132, %p133
      %s136 = sadd.s32 %s135, 1
      %p139 = scmp.eq.s32.totalorder %s17, 1
      %p140 = scmp.ne.s32.totalorder %s135, %s137
      %p141 = scmp.eq.s32.totalorder %s17, 0
      %p142 = por %p140, %p141
      %p143 = scmp.ne.s32.totalorder %s135, %s137
      %p144 = scmp.eq.s32.totalorder %s22, 1
      %p145 = por %p143, %p144
      %p146 = scmp.ne.s32.totalorder %s137, %s138
      %p147 = scmp.eq.s32.totalorder %s22, 0
      %p148 = por %p146, %p147
      %p149 = scmp.ne.s32.totalorder %s137, %s138
      %p150 = scmp.eq.s32.totalorder %s23, 1
      %p151 = por %p149, %p150
      %p153 = scmp.ne.s32.totalorder %s138, %s152
      %p154 = scmp.eq.s32.totalorder %s23, 0
      %p155 = por %p153, %p154
      %s156 = ssub.s32 %s24, %s36
      %p157 = scmp.eq.s32.totalorder %s156, 0
      %s159 = sadd.s32 %s158, 1
      %s160 = scalar_select %p157, %s158, %s159
      %p163 = pneg %p157
      %p164 = scmp.eq.s32.totalorder %s17, 1
      %p165 = por %p163, %p164
      %p166 = scmp.ne.s32.totalorder %s158, %s161
      %p167 = scmp.eq.s32.totalorder %s17, 0
      %p168 = por %p166, %p167
      %p169 = scmp.ne.s32.totalorder %s158, %s161
      %p170 = scmp.eq.s32.totalorder %s22, 1
      %p171 = por %p169, %p170
      %p172 = scmp.ne.s32.totalorder %s161, %s162
      %p173 = scmp.eq.s32.totalorder %s22, 0
      %p174 = por %p172, %p173
      %p175 = scmp.ne.s32.totalorder %s161, %s162
      %p176 = scmp.eq.s32.totalorder %s23, 1
      %p177 = por %p175, %p176
      %p179 = scmp.ne.s32.totalorder %s162, %s178
      %p180 = scmp.eq.s32.totalorder %s23, 0
      %p181 = por %p179, %p180
      %p182 = scmp.le.s32.totalorder 1, %s17
      %p183 = scmp.lt.s32.totalorder %s17, 3
      %p184 = pnand %p182, %p183
      %p185 = pneg %p184
      // Predicated region
      $region9: #{tpu_custom_call.1} parent=5 // pred_check
        _
      $region10: #{tpu_custom_call.1} parent=5 // pred_check_branch
        %187 = sbr.rel (%p184) target = $region12
      $region11: #{tpu_custom_call.1} parent=5 // pred_region
        %s188 = ssub.s32 %s17, 1
        // Predicated region
        $region13: #{tpu_custom_call.1} parent=11 // pred_check
          %p189 = pneg %p106
        $region14: #{tpu_custom_call.1} parent=11 // pred_check_branch
          %191 = sbr.rel (%p189) target = $region16
        $region15: #{tpu_custom_call.1} parent=11 // pred_region
          _
        $region16: #{tpu_custom_call.1} parent=11 // pred_fallthru
          _
        // Predicated region
        $region17: #{tpu_custom_call.1} parent=11 // pred_check
          %p192 = pneg %p127
        $region18: #{tpu_custom_call.1} parent=11 // pred_check_branch
          %194 = sbr.rel (%p192) target = $region20
        $region19: #{tpu_custom_call.1} parent=11 // pred_region
          _
        $region20: #{tpu_custom_call.1} parent=11 // pred_fallthru
          _
        // Predicated region
        $region21: #{tpu_custom_call.1} parent=11 // pred_check
          %p195 = pneg %p148
        $region22: #{tpu_custom_call.1} parent=11 // pred_check_branch
          %197 = sbr.rel (%p195) target = $region24
        $region23: #{tpu_custom_call.1} parent=11 // pred_region
          _
        $region24: #{tpu_custom_call.1} parent=11 // pred_fallthru
          _
      $region12: #{tpu_custom_call.1} parent=5 // pred_fallthru
        _
      %p198 = scmp.lt.s32.totalorder %s17, 2
      // Predicated region
      $region25: #{tpu_custom_call.1} parent=5 // pred_check
        %p199 = pneg %p198
      $region26: #{tpu_custom_call.1} parent=5 // pred_check_branch
        %201 = sbr.rel (%p199) target = $region28
      $region27: #{tpu_custom_call.1} parent=5 // pred_region
        // Predicated region
        $region29: #{tpu_custom_call.1} parent=27 // pred_check
          %p202 = pneg %p51
        $region30: #{tpu_custom_call.1} parent=27 // pred_check_branch
          %204 = sbr.rel (%p202) target = $region32
        $region31: #{tpu_custom_call.1} parent=27 // pred_region
          %s205 = sand.u32 %s41, 1
          %s206 = scalar_lea.sflag [#allocation3], %s205
          %s207 = sand.u32 %s41, 1
          %s208 = smul.addr %s207, 256
          %s209 = scalar_lea.vmem [#allocation2], %s208
          %s210 = sadd.s32 %s24, %s25
          %s211 = smul.u32 16, %s210
          %s213 = ssub.s32 4096, 4096
          %214 = vsyncadd %s206, %s213
          %s215 = smul.addr %s211, 2
          %s216 = smul.addr %s215, 128
          %s217 = scalar_lea.hbm %s0, %s216
          %s218 = sshll.u32 %s209, 4
          %s219 = int_to_ptr.vmem [resolvable:$true] %s218
          %224 = dma.hbm_to_vmem [thread:$0]  %s217, 4096, %s219, %s206, 256, 256, 16
        $region32: #{tpu_custom_call.1} parent=27 // pred_fallthru
          _
        // Predicated region
        $region33: #{tpu_custom_call.1} parent=27 // pred_check
          %p225 = pneg %p79
        $region34: #{tpu_custom_call.1} parent=27 // pred_check_branch
          %227 = sbr.rel (%p225) target = $region36
        $region35: #{tpu_custom_call.1} parent=27 // pred_region
          %s228 = sadd.s32 %s24, %s25
          %p229 = scmp.lt.s32.totalorder %s228, 1
          %s230 = scalar_select %p229, %s228, 1
          %s231 = smul.addr %s230, 2
          %s232 = scalar_lea.vmem %s1, %s231
          %s233 = sadd.s32 %s24, %s25
        $region36: #{tpu_custom_call.1} parent=27 // pred_fallthru
          _
      $region28: #{tpu_custom_call.1} parent=5 // pred_fallthru
        _
      %p234 = scmp.le.s32.totalorder 1, %s17
      %p235 = scmp.lt.s32.totalorder %s17, 3
      %p236 = pnand %p234, %p235
      %p237 = pneg %p236
      // Predicated region
      $region37: #{tpu_custom_call.1} parent=5 // pred_check
        _
      $region38: #{tpu_custom_call.1} parent=5 // pred_check_branch
        %239 = sbr.rel (%p236) target = $region40
      $region39: #{tpu_custom_call.1} parent=5 // pred_region
        %s240 = ssub.s32 %s17, 1
        %s241 = sand.u32 %s44, 1
        %s242 = scalar_lea.sflag [#allocation3], %s241
        %s243 = sand.u32 %s44, 1
        %s244 = smul.addr %s243, 256
        %s245 = scalar_lea.vmem [#allocation2], %s244
        // Predicated region
        $region41: #{tpu_custom_call.1} parent=39 // pred_check
          %p246 = pneg %p57
        $region42: #{tpu_custom_call.1} parent=39 // pred_check_branch
          %248 = sbr.rel (%p246) target = $region44
        $region43: #{tpu_custom_call.1} parent=39 // pred_region
          %249 = dma.done %s242, 4096
        $region44: #{tpu_custom_call.1} parent=39 // pred_fallthru
          _
        %s250 = sand.u32 %s44, 1
        %s251 = scalar_lea.sflag [#allocation3], %s250
        %s252 = sand.u32 %s44, 1
        %s253 = smul.addr %s252, 256
        %s254 = scalar_lea.vmem [#allocation2], %s253
        %p255 = pneg %p57
        %p256 = pneg %p54
        %s257 = sadd.s32 %s26, %s27
        %p258 = scmp.lt.s32.totalorder %s257, 1
        %s259 = scalar_select %p258, %s257, 1
        %s260 = smul.addr %s259, 2
        %s261 = scalar_lea.vmem %s1, %s260
        %p262 = pneg %p85
        %p263 = pneg %p82
        %p264 = pneg %p106
        %p265 = pneg %p103
        %p266 = pneg %p127
        %p267 = pneg %p124
        %p268 = pneg %p148
        %p269 = pneg %p145
        %p270 = pneg %p174
        %p271 = pneg %p171
        %s272 = sand.u32 %s161, 1
        %s273 = scalar_lea.sflag [#allocation4], %s272
        %s274 = sand.u32 %s161, 1
        %s275 = smul.addr %s274, 2
        %s276 = scalar_lea.vmem [#allocation5], %s275
        %s277 = sadd.s32 %s26, %s27
        %s278 = smul.u32 16, %s277
        %s279 = sadd.s32 %s26, %s27
        %p280 = scmp.lt.s32.totalorder %s279, 1
        %s281 = scalar_select %p280, %s279, 1
        %s282 = smul.addr %s281, 2
        %s283 = scalar_lea.vmem %s1, %s282
        %s284 = sadd.s32 %s26, %s27
        %p285 = scmp.eq.s32.totalorder %s27, 0
        // Predicated region
        $region45: #{tpu_custom_call.1} parent=39 // pred_check
          %p286 = pneg %p285
        $region46: #{tpu_custom_call.1} parent=39 // pred_check_branch
          %288 = sbr.rel (%p286) target = $region48
        $region47: #{tpu_custom_call.1} parent=39 // pred_region
          %vm289 = vcmask 254976
          %290 = vst.msk [vmem:[%s276] sm:$0x3] %vm289, 0.0
        $region48: #{tpu_custom_call.1} parent=39 // pred_fallthru
          _
        %v291 = vld [vmem:[%s245] sm:$0xff]
        %v292 = vld [vmem:[%s245 + $0x8] sm:$0xff]
        %v293 = vld [vmem:[%s245 + $0x10] sm:$0xff]
        %v294 = vld [vmem:[%s245 + $0x18] sm:$0xff]
        %v295 = vld [vmem:[%s245 + $0x20] sm:$0xff]
        %v296 = vld [vmem:[%s245 + $0x28] sm:$0xff]
        %v297 = vld [vmem:[%s245 + $0x30] sm:$0xff]
        %v298 = vld [vmem:[%s245 + $0x38] sm:$0xff]
        %v299 = vld [vmem:[%s245 + $0x40] sm:$0xff]
        %v300 = vld [vmem:[%s245 + $0x48] sm:$0xff]
        %v301 = vld [vmem:[%s245 + $0x50] sm:$0xff]
        %v302 = vld [vmem:[%s245 + $0x58] sm:$0xff]
        %v303 = vld [vmem:[%s245 + $0x60] sm:$0xff]
        %v304 = vld [vmem:[%s245 + $0x68] sm:$0xff]
        %v305 = vld [vmem:[%s245 + $0x70] sm:$0xff]
        %v306 = vld [vmem:[%s245 + $0x78] sm:$0xff]
        %v307 = vld [vmem:[%s245 + $0x80] sm:$0xff]
        %v308 = vld [vmem:[%s245 + $0x88] sm:$0xff]
        %v309 = vld [vmem:[%s245 + $0x90] sm:$0xff]
        %v310 = vld [vmem:[%s245 + $0x98] sm:$0xff]
        %v311 = vld [vmem:[%s245 + $0xa0] sm:$0xff]
        %v312 = vld [vmem:[%s245 + $0xa8] sm:$0xff]
        %v313 = vld [vmem:[%s245 + $0xb0] sm:$0xff]
        %v314 = vld [vmem:[%s245 + $0xb8] sm:$0xff]
        %v315 = vld [vmem:[%s245 + $0xc0] sm:$0xff]
        %v316 = vld [vmem:[%s245 + $0xc8] sm:$0xff]
        %v317 = vld [vmem:[%s245 + $0xd0] sm:$0xff]
        %v318 = vld [vmem:[%s245 + $0xd8] sm:$0xff]
        %v319 = vld [vmem:[%s245 + $0xe0] sm:$0xff]
        %v320 = vld [vmem:[%s245 + $0xe8] sm:$0xff]
        %v321 = vld [vmem:[%s245 + $0xf0] sm:$0xff]
        %v322 = vld [vmem:[%s245 + $0xf8] sm:$0xff]
        %v323 = vld [vmem:[%s2] sm:$0xff]
        %v324 = vld [vmem:[%s2 + $0x8] sm:$0xff]
        %v325 = vld [vmem:[%s2 + $0x10] sm:$0xff]
        %v326 = vld [vmem:[%s2 + $0x18] sm:$0xff]
        %v327 = vld [vmem:[%s2 + $0x20] sm:$0xff]
        %v328 = vld [vmem:[%s2 + $0x28] sm:$0xff]
        %v329 = vld [vmem:[%s2 + $0x30] sm:$0xff]
        %v330 = vld [vmem:[%s2 + $0x38] sm:$0xff]
        %v331 = vld [vmem:[%s2 + $0x40] sm:$0xff]
        %v332 = vld [vmem:[%s2 + $0x48] sm:$0xff]
        %v333 = vld [vmem:[%s2 + $0x50] sm:$0xff]
        %v334 = vld [vmem:[%s2 + $0x58] sm:$0xff]
        %v335 = vld [vmem:[%s2 + $0x60] sm:$0xff]
        %v336 = vld [vmem:[%s2 + $0x68] sm:$0xff]
        %v337 = vld [vmem:[%s2 + $0x70] sm:$0xff]
        %v338 = vld [vmem:[%s2 + $0x78] sm:$0xff]
        %v339 = vld [vmem:[%s2 + $0x80] sm:$0xff]
        %v340 = vld [vmem:[%s2 + $0x88] sm:$0xff]
        %v341 = vld [vmem:[%s2 + $0x90] sm:$0xff]
        %v342 = vld [vmem:[%s2 + $0x98] sm:$0xff]
        %v343 = vld [vmem:[%s2 + $0xa0] sm:$0xff]
        %v344 = vld [vmem:[%s2 + $0xa8] sm:$0xff]
        %v345 = vld [vmem:[%s2 + $0xb0] sm:$0xff]
        %v346 = vld [vmem:[%s2 + $0xb8] sm:$0xff]
        %v347 = vld [vmem:[%s2 + $0xc0] sm:$0xff]
        %v348 = vld [vmem:[%s2 + $0xc8] sm:$0xff]
        %v349 = vld [vmem:[%s2 + $0xd0] sm:$0xff]
        %v350 = vld [vmem:[%s2 + $0xd8] sm:$0xff]
        %v351 = vld [vmem:[%s2 + $0xe0] sm:$0xff]
        %v352 = vld [vmem:[%s2 + $0xe8] sm:$0xff]
        %v353 = vld [vmem:[%s2 + $0xf0] sm:$0xff]
        %v354 = vld [vmem:[%s2 + $0xf8] sm:$0xff]
        %v355 = vld [vmem:[%s3] sm:$0x1]
        %v357 = vlaneseq
        %v358 = vshrl.u32 %v357, 7
        %v359 = vsub.s32 0, %v358
        %v360 = vrot.slane %v355, %v359
        %362 = vmatprep.subr.mxu0 0.0
        %363 = vmatpush1.msra.mxu0 %v323
        %364 = vmatprep.subr.mxu0 0.0
        %365 = vmatpush1.msra.mxu0 %v324
        %366 = vmatprep.subr.mxu0 0.0
        %367 = vmatpush1.msra.mxu0 %v325
        %368 = vmatprep.subr.mxu0 0.0
        %369 = vmatpush1.msra.mxu0 %v326
        %370 = vmatprep.subr.mxu0 0.0
        %371 = vmatpush1.msra.mxu0 %v327
        %372 = vmatprep.subr.mxu0 0.0
        %373 = vmatpush1.msra.mxu0 %v328
        %374 = vmatprep.subr.mxu0 0.0
        %375 = vmatpush1.msra.mxu0 %v329
        %376 = vmatprep.subr.mxu0 0.0
        %377 = vmatpush1.msra.mxu0 %v330
        %378 = vmatprep.subr.mxu0 0.0
        %379 = vmatpush1.msra.mxu0 %v331
        %380 = vmatprep.subr.mxu0 0.0
        %381 = vmatpush1.msra.mxu0 %v332
        %382 = vmatprep.subr.mxu0 0.0
        %383 = vmatpush1.msra.mxu0 %v333
        %384 = vmatprep.subr.mxu0 0.0
        %385 = vmatpush1.msra.mxu0 %v334
        %386 = vmatprep.subr.mxu0 0.0
        %387 = vmatpush1.msra.mxu0 %v335
        %388 = vmatprep.subr.mxu0 0.0
        %389 = vmatpush1.msra.mxu0 %v336
        %390 = vmatprep.subr.mxu0 0.0
        %391 = vmatpush1.msra.mxu0 %v337
        %392 = vmatprep.subr.mxu0 0.0
        %393 = vmatpush1.msra.mxu0 %v338
        %394 = vmatprep.subr.mxu0 0.0
        %395 = vmatpush1.msra.mxu0 %v339
        %396 = vmatprep.subr.mxu0 0.0
        %397 = vmatpush1.msra.mxu0 %v340
        %398 = vmatprep.subr.mxu0 0.0
        %399 = vmatpush1.msra.mxu0 %v341
        %400 = vmatprep.subr.mxu0 0.0
        %401 = vmatpush1.msra.mxu0 %v342
        %402 = vmatprep.subr.mxu0 0.0
        %403 = vmatpush1.msra.mxu0 %v343
        %404 = vmatprep.subr.mxu0 0.0
        %405 = vmatpush1.msra.mxu0 %v344
        %406 = vmatprep.subr.mxu0 0.0
        %407 = vmatpush1.msra.mxu0 %v345
        %408 = vmatprep.subr.mxu0 0.0
        %409 = vmatpush1.msra.mxu0 %v346
        %410 = vmatprep.subr.mxu0 0.0
        %411 = vmatpush1.msra.mxu0 %v347
        %412 = vmatprep.subr.mxu0 0.0
        %413 = vmatpush1.msra.mxu0 %v348
        %414 = vmatprep.subr.mxu0 0.0
        %415 = vmatpush1.msra.mxu0 %v349
        %416 = vmatprep.subr.mxu0 0.0
        %417 = vmatpush1.msra.mxu0 %v350
        %418 = vmatprep.subr.mxu0 0.0
        %419 = vmatpush1.msra.mxu0 %v351
        %420 = vmatprep.subr.mxu0 0.0
        %421 = vmatpush1.msra.mxu0 %v352
        %422 = vmatprep.subr.mxu0 0.0
        %423 = vmatpush1.msra.mxu0 %v353
        %424 = vmatprep.subr.mxu0 0.0
        %425 = vmatpush1.msra.mxu0 %v354
        %426 = vmatprep.mubr.f32.mxu0 %v292
        %427 = vmatmul.mubr.f32.gmra.mrb[0].mxu0 %v291
        %v428 = vpop.f32.mrb[0].mxu0
        %v429 = vadd.f32 %v360, %v428
        %v430 = vpop.f32.mrb[0].mxu0
        %431 = vmatprep.mubr.f32.mxu0 %v294
        %432 = vmatmul.mubr.f32.gmra.mrb[0].mxu0 %v293
        %v433 = vpop.f32.mrb[0].mxu0
        %v434 = vadd.f32 %v360, %v433
        %v435 = vpop.f32.mrb[0].mxu0
        %436 = vmatprep.mubr.f32.mxu0 %v296
        %437 = vmatmul.mubr.f32.gmra.mrb[0].mxu0 %v295
        %v438 = vpop.f32.mrb[0].mxu0
        %v439 = vadd.f32 %v360, %v438
        %v440 = vpop.f32.mrb[0].mxu0
        %441 = vmatprep.mubr.f32.mxu0 %v298
        %442 = vmatmul.mubr.f32.gmra.mrb[0].mxu0 %v297
        %v443 = vpop.f32.mrb[0].mxu0
        %v444 = vadd.f32 %v360, %v443
        %v445 = vpop.f32.mrb[0].mxu0
        %446 = vmatprep.mubr.f32.mxu0 %v300
        %447 = vmatmul.mubr.f32.gmra.mrb[0].mxu0 %v299
        %v448 = vpop.f32.mrb[0].mxu0
        %v449 = vadd.f32 %v360, %v448
        %v450 = vpop.f32.mrb[0].mxu0
        %451 = vmatprep.mubr.f32.mxu0 %v302
        %452 = vmatmul.mubr.f32.gmra.mrb[0].mxu0 %v301
        %v453 = vpop.f32.mrb[0].mxu0
        %v454 = vadd.f32 %v360, %v453
        %v455 = vpop.f32.mrb[0].mxu0
        %456 = vmatprep.mubr.f32.mxu0 %v304
        %457 = vmatmul.mubr.f32.gmra.mrb[0].mxu0 %v303
        %v458 = vpop.f32.mrb[0].mxu0
        %v459 = vadd.f32 %v360, %v458
        %v460 = vpop.f32.mrb[0].mxu0
        %461 = vmatprep.mubr.f32.mxu0 %v306
        %462 = vmatmul.mubr.f32.gmra.mrb[0].mxu0 %v305
        %v463 = vpop.f32.mrb[0].mxu0
        %v464 = vadd.f32 %v360, %v463
        %v465 = vpop.f32.mrb[0].mxu0
        %466 = vmatprep.mubr.f32.mxu0 %v308
        %467 = vmatmul.mubr.f32.gmra.mrb[0].mxu0 %v307
        %v468 = vpop.f32.mrb[0].mxu0
        %v469 = vadd.f32 %v360, %v468
        %v470 = vpop.f32.mrb[0].mxu0
        %471 = vmatprep.mubr.f32.mxu0 %v310
        %472 = vmatmul.mubr.f32.gmra.mrb[0].mxu0 %v309
        %v473 = vpop.f32.mrb[0].mxu0
        %v474 = vadd.f32 %v360, %v473
        %v475 = vpop.f32.mrb[0].mxu0
        %476 = vmatprep.mubr.f32.mxu0 %v312
        %477 = vmatmul.mubr.f32.gmra.mrb[0].mxu0 %v311
        %v478 = vpop.f32.mrb[0].mxu0
        %v479 = vadd.f32 %v360, %v478
        %v480 = vpop.f32.mrb[0].mxu0
        %481 = vmatprep.mubr.f32.mxu0 %v314
        %482 = vmatmul.mubr.f32.gmra.mrb[0].mxu0 %v313
        %v483 = vpop.f32.mrb[0].mxu0
        %v484 = vadd.f32 %v360, %v483
        %v485 = vpop.f32.mrb[0].mxu0
        %486 = vmatprep.mubr.f32.mxu0 %v316
        %487 = vmatmul.mubr.f32.gmra.mrb[0].mxu0 %v315
        %v488 = vpop.f32.mrb[0].mxu0
        %v489 = vadd.f32 %v360, %v488
        %v490 = vpop.f32.mrb[0].mxu0
        %491 = vmatprep.mubr.f32.mxu0 %v318
        %492 = vmatmul.mubr.f32.gmra.mrb[0].mxu0 %v317
        %v493 = vpop.f32.mrb[0].mxu0
        %v494 = vadd.f32 %v360, %v493
        %v495 = vpop.f32.mrb[0].mxu0
        %496 = vmatprep.mubr.f32.mxu0 %v320
        %497 = vmatmul.mubr.f32.gmra.mrb[0].mxu0 %v319
        %v498 = vpop.f32.mrb[0].mxu0
        %v499 = vadd.f32 %v360, %v498
        %v500 = vpop.f32.mrb[0].mxu0
        %501 = vmatprep.mubr.f32.mxu0 %v322
        %502 = vmatmul.mubr.f32.gmra.mrb[0].mxu0 %v321
        %v503 = vpop.f32.mrb[0].mxu0
        %v504 = vadd.f32 %v360, %v503
        %v505 = vpop.f32.mrb[0].mxu0
        %506 = vdwg.mxu0
        %v507 = vmax.f32 %v429, 0.0
        %v508 = vmax.f32 %v434, 0.0
        %v509 = vmax.f32 %v439, 0.0
        %v510 = vmax.f32 %v444, 0.0
        %v511 = vmax.f32 %v449, 0.0
        %v512 = vmax.f32 %v454, 0.0
        %v513 = vmax.f32 %v459, 0.0
        %v514 = vmax.f32 %v464, 0.0
        %v515 = vmax.f32 %v469, 0.0
        %v516 = vmax.f32 %v474, 0.0
        %v517 = vmax.f32 %v479, 0.0
        %v518 = vmax.f32 %v484, 0.0
        %v519 = vmax.f32 %v489, 0.0
        %v520 = vmax.f32 %v494, 0.0
        %v521 = vmax.f32 %v499, 0.0
        %v522 = vmax.f32 %v504, 0.0
        %v523 = vld [vmem:[%s4] sm:$0xff]
        %v524 = vld [vmem:[%s4 + $0x8] sm:$0xff]
        %v525 = vld [vmem:[%s4 + $0x10] sm:$0xff]
        %v526 = vld [vmem:[%s4 + $0x18] sm:$0xff]
        %vm527 = vcmask 261120
        %v529 = vsel %vm527, %v507, 0
        %v532 = vsel %vm527, %v508, 0
        %v535 = vsel %vm527, %v509, 0
        %v538 = vsel %vm527, %v510, 0
        %v541 = vsel %vm527, %v511, 0
        %v544 = vsel %vm527, %v512, 0
        %v547 = vsel %vm527, %v513, 0
        %v550 = vsel %vm527, %v514, 0
        %v553 = vsel %vm527, %v515, 0
        %v556 = vsel %vm527, %v516, 0
        %v559 = vsel %vm527, %v517, 0
        %v562 = vsel %vm527, %v518, 0
        %v565 = vsel %vm527, %v519, 0
        %v568 = vsel %vm527, %v520, 0
        %v571 = vsel %vm527, %v521, 0
        %v574 = vsel %vm527, %v522, 0
        %576 = vmatprep.subr.mxu0 0.0
        %577 = vmatpush1.msra.mxu0 %v523
        %578 = vmatprep.subr.mxu0 0.0
        %579 = vmatpush1.msra.mxu0 %v524
        %580 = vmatprep.subr.mxu0 0.0
        %581 = vmatpush1.msra.mxu0 %v525
        %582 = vmatprep.subr.mxu0 0.0
        %583 = vmatpush1.msra.mxu0 %v526
        %584 = vmatprep.subr.mxu0 0.0
        %585 = vmatpush1.msra.mxu0 0.0
        %586 = vmatprep.subr.mxu0 0.0
        %587 = vmatpush1.msra.mxu0 0.0
        %588 = vmatprep.subr.mxu0 0.0
        %589 = vmatpush1.msra.mxu0 0.0
        %590 = vmatprep.subr.mxu0 0.0
        %591 = vmatpush1.msra.mxu0 0.0
        %592 = vmatprep.subr.mxu0 0.0
        %593 = vmatpush1.msra.mxu0 0.0
        %594 = vmatprep.subr.mxu0 0.0
        %595 = vmatpush1.msra.mxu0 0.0
        %596 = vmatprep.subr.mxu0 0.0
        %597 = vmatpush1.msra.mxu0 0.0
        %598 = vmatprep.subr.mxu0 0.0
        %599 = vmatpush1.msra.mxu0 0.0
        %600 = vmatprep.subr.mxu0 0.0
        %601 = vmatpush1.msra.mxu0 0.0
        %602 = vmatprep.subr.mxu0 0.0
        %603 = vmatpush1.msra.mxu0 0.0
        %604 = vmatprep.subr.mxu0 0.0
        %605 = vmatpush1.msra.mxu0 0.0
        %606 = vmatprep.subr.mxu0 0.0
        %607 = vmatpush1.msra.mxu0 0.0
        %608 = vmatprep.subr.mxu0 0.0
        %609 = vmatpush1.msra.mxu0 0.0
        %610 = vmatprep.subr.mxu0 0.0
        %611 = vmatpush1.msra.mxu0 0.0
        %612 = vmatprep.subr.mxu0 0.0
        %613 = vmatpush1.msra.mxu0 0.0
        %614 = vmatprep.subr.mxu0 0.0
        %615 = vmatpush1.msra.mxu0 0.0
        %616 = vmatprep.subr.mxu0 0.0
        %617 = vmatpush1.msra.mxu0 0.0
        %618 = vmatprep.subr.mxu0 0.0
        %619 = vmatpush1.msra.mxu0 0.0
        %620 = vmatprep.subr.mxu0 0.0
        %621 = vmatpush1.msra.mxu0 0.0
        %622 = vmatprep.subr.mxu0 0.0
        %623 = vmatpush1.msra.mxu0 0.0
        %624 = vmatprep.subr.mxu0 0.0
        %625 = vmatpush1.msra.mxu0 0.0
        %626 = vmatprep.subr.mxu0 0.0
        %627 = vmatpush1.msra.mxu0 0.0
        %628 = vmatprep.subr.mxu0 0.0
        %629 = vmatpush1.msra.mxu0 0.0
        %630 = vmatprep.subr.mxu0 0.0
        %631 = vmatpush1.msra.mxu0 0.0
        %632 = vmatprep.subr.mxu0 0.0
        %633 = vmatpush1.msra.mxu0 0.0
        %634 = vmatprep.subr.mxu0 0.0
        %635 = vmatpush1.msra.mxu0 0.0
        %636 = vmatprep.subr.mxu0 0.0
        %637 = vmatpush1.msra.mxu0 0.0
        %638 = vmatprep.subr.mxu0 0.0
        %639 = vmatpush1.msra.mxu0 0.0
        %640 = vmatprep.mubr.f32.mxu0 0.0
        %641 = vmatmul.mubr.f32.gmra.mrb[0].mxu0 %v529
        %v642 = vpop.f32.mrb[0].mxu0
        %v643 = vadd.f32 0.0, %v642
        %v644 = vpop.f32.mrb[0].mxu0
        %645 = vmatprep.mubr.f32.mxu0 0.0
        %646 = vmatmul.mubr.f32.gmra.mrb[0].mxu0 %v532
        %v647 = vpop.f32.mrb[0].mxu0
        %v648 = vadd.f32 0.0, %v647
        %v649 = vpop.f32.mrb[0].mxu0
        %650 = vmatprep.mubr.f32.mxu0 0.0
        %651 = vmatmul.mubr.f32.gmra.mrb[0].mxu0 %v535
        %v652 = vpop.f32.mrb[0].mxu0
        %v653 = vadd.f32 0.0, %v652
        %v654 = vpop.f32.mrb[0].mxu0
        %655 = vmatprep.mubr.f32.mxu0 0.0
        %656 = vmatmul.mubr.f32.gmra.mrb[0].mxu0 %v538
        %v657 = vpop.f32.mrb[0].mxu0
        %v658 = vadd.f32 0.0, %v657
        %v659 = vpop.f32.mrb[0].mxu0
        %660 = vmatprep.mubr.f32.mxu0 0.0
        %661 = vmatmul.mubr.f32.gmra.mrb[0].mxu0 %v541
        %v662 = vpop.f32.mrb[0].mxu0
        %v663 = vadd.f32 0.0, %v662
        %v664 = vpop.f32.mrb[0].mxu0
        %665 = vmatprep.mubr.f32.mxu0 0.0
        %666 = vmatmul.mubr.f32.gmra.mrb[0].mxu0 %v544
        %v667 = vpop.f32.mrb[0].mxu0
        %v668 = vadd.f32 0.0, %v667
        %v669 = vpop.f32.mrb[0].mxu0
        %670 = vmatprep.mubr.f32.mxu0 0.0
        %671 = vmatmul.mubr.f32.gmra.mrb[0].mxu0 %v547
        %v672 = vpop.f32.mrb[0].mxu0
        %v673 = vadd.f32 0.0, %v672
        %v674 = vpop.f32.mrb[0].mxu0
        %675 = vmatprep.mubr.f32.mxu0 0.0
        %676 = vmatmul.mubr.f32.gmra.mrb[0].mxu0 %v550
        %v677 = vpop.f32.mrb[0].mxu0
        %v678 = vadd.f32 0.0, %v677
        %v679 = vpop.f32.mrb[0].mxu0
        %680 = vmatprep.mubr.f32.mxu0 0.0
        %681 = vmatmul.mubr.f32.gmra.mrb[0].mxu0 %v553
        %v682 = vpop.f32.mrb[0].mxu0
        %v683 = vadd.f32 0.0, %v682
        %v684 = vpop.f32.mrb[0].mxu0
        %685 = vmatprep.mubr.f32.mxu0 0.0
        %686 = vmatmul.mubr.f32.gmra.mrb[0].mxu0 %v556
        %v687 = vpop.f32.mrb[0].mxu0
        %v688 = vadd.f32 0.0, %v687
        %v689 = vpop.f32.mrb[0].mxu0
        %690 = vmatprep.mubr.f32.mxu0 0.0
        %691 = vmatmul.mubr.f32.gmra.mrb[0].mxu0 %v559
        %v692 = vpop.f32.mrb[0].mxu0
        %v693 = vadd.f32 0.0, %v692
        %v694 = vpop.f32.mrb[0].mxu0
        %695 = vmatprep.mubr.f32.mxu0 0.0
        %696 = vmatmul.mubr.f32.gmra.mrb[0].mxu0 %v562
        %v697 = vpop.f32.mrb[0].mxu0
        %v698 = vadd.f32 0.0, %v697
        %v699 = vpop.f32.mrb[0].mxu0
        %700 = vmatprep.mubr.f32.mxu0 0.0
        %701 = vmatmul.mubr.f32.gmra.mrb[0].mxu0 %v565
        %v702 = vpop.f32.mrb[0].mxu0
        %v703 = vadd.f32 0.0, %v702
        %v704 = vpop.f32.mrb[0].mxu0
        %705 = vmatprep.mubr.f32.mxu0 0.0
        %706 = vmatmul.mubr.f32.gmra.mrb[0].mxu0 %v568
        %v707 = vpop.f32.mrb[0].mxu0
        %v708 = vadd.f32 0.0, %v707
        %v709 = vpop.f32.mrb[0].mxu0
        %710 = vmatprep.mubr.f32.mxu0 0.0
        %711 = vmatmul.mubr.f32.gmra.mrb[0].mxu0 %v571
        %v712 = vpop.f32.mrb[0].mxu0
        %v713 = vadd.f32 0.0, %v712
        %v714 = vpop.f32.mrb[0].mxu0
        %715 = vmatprep.mubr.f32.mxu0 0.0
        %716 = vmatmul.mubr.f32.gmra.mrb[0].mxu0 %v574
        %v717 = vpop.f32.mrb[0].mxu0
        %v718 = vadd.f32 0.0, %v717
        %v719 = vpop.f32.mrb[0].mxu0
        %720 = vdwg.mxu0
        %v721 = vld [vmem:[%s283] sm:$0x3]
        %722 = vmatprep.subr.mxu0 0.0
        %723 = vmatpush1.msra.mxu0 %v643
        %724 = vmatprep.subr.mxu0 0.0
        %725 = vmatpush1.msra.mxu0 %v648
        %726 = vmatprep.subr.mxu0 0.0
        %727 = vmatpush1.msra.mxu0 %v653
        %728 = vmatprep.subr.mxu0 0.0
        %729 = vmatpush1.msra.mxu0 %v658
        %730 = vmatprep.subr.mxu0 0.0
        %731 = vmatpush1.msra.mxu0 %v663
        %732 = vmatprep.subr.mxu0 0.0
        %733 = vmatpush1.msra.mxu0 %v668
        %734 = vmatprep.subr.mxu0 0.0
        %735 = vmatpush1.msra.mxu0 %v673
        %736 = vmatprep.subr.mxu0 0.0
        %737 = vmatpush1.msra.mxu0 %v678
        %738 = vmatprep.subr.mxu0 0.0
        %739 = vmatpush1.msra.mxu0 %v683
        %740 = vmatprep.subr.mxu0 0.0
        %741 = vmatpush1.msra.mxu0 %v688
        %742 = vmatprep.subr.mxu0 0.0
        %743 = vmatpush1.msra.mxu0 %v693
        %744 = vmatprep.subr.mxu0 0.0
        %745 = vmatpush1.msra.mxu0 %v698
        %746 = vmatprep.subr.mxu0 0.0
        %747 = vmatpush1.msra.mxu0 %v703
        %748 = vmatprep.subr.mxu0 0.0
        %749 = vmatpush1.msra.mxu0 %v708
        %750 = vmatprep.subr.mxu0 0.0
        %751 = vmatpush1.msra.mxu0 %v713
        %752 = vmatprep.subr.mxu0 0.0
        %753 = vmatpush1.msra.mxu0 %v718
        %754 = vmatprep.subr.mxu0 0.0
        %755 = vmatpush1.msra.mxu0 0.0
        %756 = vmatprep.subr.mxu0 0.0
        %757 = vmatpush1.msra.mxu0 0.0
        %758 = vmatprep.subr.mxu0 0.0
        %759 = vmatpush1.msra.mxu0 0.0
        %760 = vmatprep.subr.mxu0 0.0
        %761 = vmatpush1.msra.mxu0 0.0
        %762 = vmatprep.subr.mxu0 0.0
        %763 = vmatpush1.msra.mxu0 0.0
        %764 = vmatprep.subr.mxu0 0.0
        %765 = vmatpush1.msra.mxu0 0.0
        %766 = vmatprep.subr.mxu0 0.0
        %767 = vmatpush1.msra.mxu0 0.0
        %768 = vmatprep.subr.mxu0 0.0
        %769 = vmatpush1.msra.mxu0 0.0
        %770 = vmatprep.subr.mxu0 0.0
        %771 = vmatpush1.msra.mxu0 0.0
        %772 = vmatprep.subr.mxu0 0.0
        %773 = vmatpush1.msra.mxu0 0.0
        %774 = vmatprep.subr.mxu0 0.0
        %775 = vmatpush1.msra.mxu0 0.0
        %776 = vmatprep.subr.mxu0 0.0
        %777 = vmatpush1.msra.mxu0 0.0
        %778 = vmatprep.subr.mxu0 0.0
        %779 = vmatpush1.msra.mxu0 0.0
        %780 = vmatprep.subr.mxu0 0.0
        %781 = vmatpush1.msra.mxu0 0.0
        %782 = vmatprep.subr.mxu0 0.0
        %783 = vmatpush1.msra.mxu0 0.0
        %784 = vmatprep.subr.mxu0 0.0
        %785 = vmatpush1.msra.mxu0 0.0
        %786 = vmatprep.mubr.f32.mxu0 0.0
        %787 = vmatmul.mubr.f32.gmra.mrb[0].mxu0 %v721
        %v788 = vpop.f32.mrb[0].mxu0
        %v789 = vadd.f32 0.0, %v788
        %v790 = vpop.f32.mrb[0].mxu0
        %791 = vdwg.mxu0
        %v792 = vld [vmem:[%s276] sm:$0x3]
        %v793 = vadd.f32 %v792, %v789
        %vm794 = vcmask 254976
        %795 = vst.msk [vmem:[%s276] sm:$0x3] %vm794, %v793
        %s796 = sand.u32 %s161, 1
        %s797 = scalar_lea.sflag [#allocation4], %s796
        %s798 = sand.u32 %s161, 1
        %s799 = smul.addr %s798, 2
        %s800 = scalar_lea.vmem [#allocation5], %s799
        // Predicated region
        $region49: #{tpu_custom_call.1} parent=39 // pred_check
          %p801 = pneg %p171
        $region50: #{tpu_custom_call.1} parent=39 // pred_check_branch
          %803 = sbr.rel (%p801) target = $region52
        $region51: #{tpu_custom_call.1} parent=39 // pred_region
          %s805 = ssub.s32 32, 32
          %806 = vsyncadd %s797, %s805
          %s807 = smul.addr %s26, 32
          %s808 = scalar_lea.hbm %s5, %s807
          %s810 = sshll.u32 %s800, 4
          %s811 = int_to_ptr.vmem [resolvable:$true] %s810
          %813 = dma.vmem_to_hbm [thread:$0]  %s811, 32, %s808, %s797
        $region52: #{tpu_custom_call.1} parent=39 // pred_fallthru
          _
      $region40: #{tpu_custom_call.1} parent=5 // pred_fallthru
        _
      %p814 = scmp.le.s32.totalorder 2, %s17
      // Predicated region
      $region53: #{tpu_custom_call.1} parent=5 // pred_check
        %p815 = pneg %p814
      $region54: #{tpu_custom_call.1} parent=5 // pred_check_branch
        %817 = sbr.rel (%p815) target = $region56
      $region55: #{tpu_custom_call.1} parent=5 // pred_region
        %s818 = ssub.s32 %s17, 2
        // Predicated region
        $region57: #{tpu_custom_call.1} parent=55 // pred_check
          %p819 = pneg %p177
        $region58: #{tpu_custom_call.1} parent=55 // pred_check_branch
          %821 = sbr.rel (%p819) target = $region60
        $region59: #{tpu_custom_call.1} parent=55 // pred_region
          %s822 = sand.u32 %s162, 1
          %s823 = scalar_lea.sflag [#allocation4], %s822
          %s824 = sand.u32 %s162, 1
          %s825 = smul.addr %s824, 2
          %s826 = scalar_lea.vmem [#allocation5], %s825
          %827 = dma.done %s823, 32
        $region60: #{tpu_custom_call.1} parent=55 // pred_fallthru
          _
      $region56: #{tpu_custom_call.1} parent=5 // pred_fallthru
        _
    $region6: #{tpu_custom_call.1} parent=1 // loop_footer
      %s21 = sadd.s32 1, %s17
    $region7: #{tpu_custom_call.1} parent=1 // loop_footer_branch
      %16 = sbr.rel target = $region3
    $region8: #{tpu_custom_call.1} parent=1 // loop_exit
      _
    %828 = vsyncpa [#allocation3], 1
    %s829 = scalar_lea.sflag [#allocation3], 1
    %830 = vsyncpa %s829, 1
    %831 = vsyncpa [#allocation4], 1
    %s832 = scalar_lea.sflag [#allocation4], 1
    %833 = vsyncpa %s832, 1

</llo_original>
